<compile_context>
chip_gen: v5e
topology: v5e:2x2
jax: 0.10.0
libtpu: 0.0.40
codegen_flags: <defaults>
</compile_context>

<pallas_src>
import jax
import jax.numpy as jnp
from jax.experimental import pallas as pl
from jax.experimental.pallas import tpu as pltpu


def _freq_mask_kernel(x_ref, m_ref, hi_ref, lo_ref):
    x = x_ref[...]                          # (bt, lt)
    m = m_ref[...].astype(x.dtype)          # (1, lt) — broadcasts over rows
    hi_ref[...] = (x * m).astype(hi_ref.dtype)
    lo_ref[...] = (x * (1.0 - m)).astype(lo_ref.dtype)


def _choose_tiles(B, L, itemsize, target_block_bytes=4 * 1024 * 1024):
    """Pick (bt, lt) for the flattened (B, L) layout, ~target bytes per block.

    lt is full L or a multiple of 128 (lane-dense); bt is full B or a multiple
    of 8 (sublane constraint).  Block bytes are bounded by target_block_bytes,
    so very large L is clamped instead of growing without bound.
    """
    max_lane_elems = max(128, target_block_bytes // itemsize)
    if L <= max_lane_elems:
        lt = L
    else:
        lt = (max_lane_elems // 128) * 128
    rows = max(1, target_block_bytes // (lt * itemsize))
    if rows >= B:
        bt = B
        # v7x has 2 TensorCores; when everything fits one block but B is big
        # enough, split B so both cores get work (harmless on 1-TC chips).
        if B >= 16:
            bt = max(8, (pl.cdiv(B, 2) // 8) * 8)
    else:
        bt = min(B, max(8, (rows // 8) * 8))
    return bt, lt


def learnable_freq_mask(freq_x, mask_param):
    """Pallas implementation of LearnableFreqMask.forward.

    freq_x:     (B, S, F)
    mask_param: (1, S, 1)
    returns (high_freq, low_freq, mask)
    """
    B, S, F = freq_x.shape
    L = S * F
    itemsize = jnp.dtype(freq_x.dtype).itemsize

    # Tiny S-element transcendental, computed once in the wrapper.  This is
    # also the third module output (shape (1, S, 1), matching PyTorch).
    mask = jax.nn.sigmoid(mask_param)                           # (1, S, 1)

    # Lane-dense flattening: (B, S, F) -> (B, S*F); mask -> (1, S*F) row.
    x2 = freq_x.reshape(B, L)
    mask_row = jnp.broadcast_to(mask, (1, S, F)).reshape(1, L)  # (1, L)

    bt, lt = _choose_tiles(B, L, itemsize)
    # B innermost (fastest) so the mask block index is constant across the
    # inner loop -> Pallas skips redundant mask DMAs.
    grid = (pl.cdiv(L, lt), pl.cdiv(B, bt))

    data_spec = pl.BlockSpec((bt, lt), lambda j, i: (i, j))
    mask_spec = pl.BlockSpec((1, lt), lambda j, i: (0, j))

    # Explicit VMEM budget: 3 double-buffered data streams + the 8-sublane
    # padded (1, lt) mask buffers + slack.  Kept <= 60 MiB (safe on v7x's
    # 64 MiB physical VMEM); raised above the 16 MiB v5e scoped default.
    block_bytes = bt * lt * itemsize
    mask_bytes = 8 * lt * jnp.dtype(mask_row.dtype).itemsize
    vmem_bytes = 2 * (3 * block_bytes + mask_bytes) + (2 << 20)
    vmem_bytes = int(min(max(vmem_bytes, 4 << 20), 60 << 20))

    hi2, lo2 = pl.pallas_call(
        _freq_mask_kernel,
        out_shape=(
            jax.ShapeDtypeStruct((B, L), freq_x.dtype),
            jax.ShapeDtypeStruct((B, L), freq_x.dtype),
        ),
        grid=grid,
        in_specs=[data_spec, mask_spec],
        out_specs=(data_spec, data_spec),
        compiler_params=pltpu.CompilerParams(
            dimension_semantics=("parallel", "parallel"),
            vmem_limit_bytes=vmem_bytes),
        cost_estimate=pl.CostEstimate(
            flops=3 * B * L,
            transcendentals=0,
            bytes_accessed=(3 * B * L + L) * itemsize),
    )(x2, mask_row)

    high_freq = hi2.reshape(B, S, F)
    low_freq = lo2.reshape(B, S, F)
    return high_freq, low_freq, mask


if __name__ == "__main__":
    B, S, F = 2, 8, 32  # batch, seq_len, feature_dim

    key = jax.random.PRNGKey(0)
    freq_x = jax.random.normal(key, (B, S, F), dtype=jnp.float32)

    # Deterministic parameter init, matching torch.full((1, seq_len, 1), 0.5)
    mask_param = jnp.full((1, S, 1), 0.5, dtype=jnp.float32)

    high_freq, low_freq, mask = learnable_freq_mask(freq_x, mask_param)
    jax.block_until_ready((high_freq, low_freq, mask))

    # Reference check in plain JAX
    ref_mask = jax.nn.sigmoid(mask_param)
    ref_hi = freq_x * ref_mask
    ref_lo = freq_x * (1.0 - ref_mask)
    assert mask.shape == (1, S, 1)
    assert jnp.allclose(mask, ref_mask, atol=1e-6)
    assert jnp.allclose(high_freq, ref_hi, atol=1e-6)
    assert jnp.allclose(low_freq, ref_lo, atol=1e-6)

    print("KERNEL_OK")
</pallas_src>

<mosaic_0001>
module attributes {stable_mosaic.version = 11 : i64} {
  func.func @_freq_mask_kernel(%arg0: i32, %arg1: i32, %arg2: memref<2x256xf32, #tpu.memory_space<vmem>>, %arg3: memref<1x256xf32, #tpu.memory_space<vmem>>, %arg4: memref<2x256xf32, #tpu.memory_space<vmem>>, %arg5: memref<2x256xf32, #tpu.memory_space<vmem>>) attributes {dimension_semantics = [#tpu.dimension_semantics<parallel>, #tpu.dimension_semantics<parallel>], iteration_bounds = array<i64: 1, 1>, scalar_prefetch = 0 : i64, scratch_operands = 0 : i64, tpu.core_type = #tpu.core_type<tc>, window_params = [{transform_indices = @transform_0, window_bounds = array<i64: 2, 256>}, {transform_indices = @transform_1, window_bounds = array<i64: 1, 256>}, {transform_indices = @transform_2, window_bounds = array<i64: 2, 256>}, {transform_indices = @transform_3, window_bounds = array<i64: 2, 256>}]} {
    %c0 = arith.constant 0 : index
    %c0_0 = arith.constant 0 : index
    %0 = vector.load %arg2[%c0, %c0_0] : memref<2x256xf32, #tpu.memory_space<vmem>>, vector<2x256xf32>
    %c0_1 = arith.constant 0 : index
    %c0_2 = arith.constant 0 : index
    %1 = vector.load %arg3[%c0_1, %c0_2] : memref<1x256xf32, #tpu.memory_space<vmem>>, vector<1x256xf32>
    %2 = vector.broadcast %1 : vector<1x256xf32> to vector<2x256xf32>
    %3 = arith.mulf %0, %2 : vector<2x256xf32>
    %c0_3 = arith.constant 0 : index
    %c0_4 = arith.constant 0 : index
    %4 = vector.load %arg4[%c0_3, %c0_4] : memref<2x256xf32, #tpu.memory_space<vmem>>, vector<2x256xf32>
    tpu.vector_store %arg4[%c0_3, %c0_4], %3 {strides = array<i32>} : memref<2x256xf32, #tpu.memory_space<vmem>>, vector<2x256xf32>,
    %cst = arith.constant 1.000000e+00 : f32
    %5 = vector.broadcast %cst : f32 to vector<1x256xf32>
    %6 = arith.subf %5, %1 : vector<1x256xf32>
    %7 = vector.broadcast %6 : vector<1x256xf32> to vector<2x256xf32>
    %8 = arith.mulf %0, %7 : vector<2x256xf32>
    %c0_5 = arith.constant 0 : index
    %c0_6 = arith.constant 0 : index
    %9 = vector.load %arg5[%c0_5, %c0_6] : memref<2x256xf32, #tpu.memory_space<vmem>>, vector<2x256xf32>
    tpu.vector_store %arg5[%c0_5, %c0_6], %8 {strides = array<i32>} : memref<2x256xf32, #tpu.memory_space<vmem>>, vector<2x256xf32>,
    return
  }
  func.func @transform_0(%arg0: i32, %arg1: i32) -> (i32, i32) {
    %c0_i32 = arith.constant 0 : i32
    return %arg1, %arg0 : i32, i32
  }
  func.func @transform_1(%arg0: i32, %arg1: i32) -> (i32, i32) {
    %c0_i32 = arith.constant 0 : i32
    %c0_i32_0 = arith.constant 0 : i32
    return %c0_i32, %arg0 : i32, i32
  }
  func.func @transform_2(%arg0: i32, %arg1: i32) -> (i32, i32) {
    %c0_i32 = arith.constant 0 : i32
    return %arg1, %arg0 : i32, i32
  }
  func.func @transform_3(%arg0: i32, %arg1: i32) -> (i32, i32) {
    %c0_i32 = arith.constant 0 : i32
    return %arg1, %arg0 : i32, i32
  }
}

</mosaic_0001>

<llo_original>
// kernel: tpu_custom_call.1
$region0: #{tpu_custom_call.1}
  #allocation0 [shape = 'u32[]', space=smem, size = 0x4, offset = 0x4, fixed_abs, tag = 'smem constant byte address 0x4 - core index']
  #allocation1 [shape = 'u32[72,128]{1,0:T(1,128)}', space=vmem, size = 0x9000, scoped, tag = 'internal scratch']
  %s0 = inlined_call_operand.hbm [shape: f32[2,256], index: 0, kind: input, shape index: {}]
  %s1 = inlined_call_operand.hbm [shape: f32[1,256], index: 1, kind: input, shape index: {}]
  %s2 = inlined_call_operand.hbm [shape: f32[2,256], index: 2, kind: output, shape index: {0}]
  %s3 = inlined_call_operand.hbm [shape: f32[2,256], index: 3, kind: output, shape index: {1}]
  %4 = xla_tuple %s2, %s3
  %s5 = sld [smem:[#allocation0]]
  $region34: #{tpu_custom_call.1} parent=0
    _
  %s7 = ssub.s32 1, %s5
  %s8 = scalar_select 0, %s7, %s5
  $region1: #{tpu_custom_call.1} parent=0
    #allocation2 [shape = 'u8[2048]{0}', space=vmem, size = 0x800, scoped, tag = 'input window, operand 0, single buffered']
    #allocation3 [shape = 's32[1]{0}', space=sflag, size = 0x4, scoped, tag = 'scoped memory for tpu_custom_call.1']
    #allocation4 [shape = 's32[1]{0}', space=sflag, size = 0x4, scoped, tag = 'scoped memory for tpu_custom_call.1']
    #allocation5 [shape = 'u8[1024]{0}', space=vmem, size = 0x400, scoped, tag = 'input window, operand 1, single buffered']
    #allocation6 [shape = 's32[1]{0}', space=sflag, size = 0x4, scoped, tag = 'scoped memory for tpu_custom_call.1']
    #allocation7 [shape = 'u8[2048]{0}', space=vmem, size = 0x800, scoped, tag = 'output window, operand 0, single buffered']
    #allocation8 [shape = 'u8[2048]{0}', space=vmem, size = 0x800, scoped, tag = 'output window, operand 1, single buffered']
    #allocation9 [shape = 's32[1]{0}', space=sflag, size = 0x4, scoped, tag = 'scoped memory for tpu_custom_call.1']
    %9 = vsyncpa [#allocation3], 0
    %10 = vsyncpa [#allocation6], 0
    %11 = vsyncpa [#allocation4], 0
    %12 = vsyncpa [#allocation9], 0
    // Predicated region
    $region2: #{tpu_custom_call.1} parent=1 // pred_check
      _
    $region3: #{tpu_custom_call.1} parent=1 // pred_check_branch
      %14 = sbr.rel (0) target = $region5
    $region4: #{tpu_custom_call.1} parent=1 // pred_region
      %16 = vsyncadd [#allocation3], 0
      %s18 = sshll.u32 %s0, 4
      %s19 = int_to_ptr.hbm [resolvable:$true] %s18
      %s20 = sshll.u32 [#allocation2], 4
      %s21 = int_to_ptr.vmem [resolvable:$true] %s20
      %23 = dma.hbm_to_vmem [thread:$0]  %s19, 64, %s21, [#allocation3]
    $region5: #{tpu_custom_call.1} parent=1 // pred_fallthru
      _
    // Predicated region
    $region6: #{tpu_custom_call.1} parent=1 // pred_check
      _
    $region7: #{tpu_custom_call.1} parent=1 // pred_check_branch
      %25 = sbr.rel (0) target = $region9
    $region8: #{tpu_custom_call.1} parent=1 // pred_region
      %27 = vsyncadd [#allocation6], 0
      %s29 = sshll.u32 %s1, 4
      %s30 = int_to_ptr.hbm [resolvable:$true] %s29
      %s31 = sshll.u32 [#allocation5], 4
      %s32 = int_to_ptr.vmem [resolvable:$true] %s31
      %34 = dma.hbm_to_vmem [thread:$0]  %s30, 32, %s32, [#allocation6]
    $region9: #{tpu_custom_call.1} parent=1 // pred_fallthru
      _
    // Predicated region
    $region10: #{tpu_custom_call.1} parent=1 // pred_check
      _
    $region11: #{tpu_custom_call.1} parent=1 // pred_check_branch
      %36 = sbr.rel (0) target = $region13
    $region12: #{tpu_custom_call.1} parent=1 // pred_region
      %38 = dma.done [#allocation3], 64
    $region13: #{tpu_custom_call.1} parent=1 // pred_fallthru
      _
    // Predicated region
    $region14: #{tpu_custom_call.1} parent=1 // pred_check
      _
    $region15: #{tpu_custom_call.1} parent=1 // pred_check_branch
      %40 = sbr.rel (0) target = $region17
    $region16: #{tpu_custom_call.1} parent=1 // pred_region
      %42 = dma.done [#allocation6], 32
    $region17: #{tpu_custom_call.1} parent=1 // pred_fallthru
      _
    %v43 = vld [vmem:[#allocation2] sm:$0xf]
    %v44 = vld [vmem:[#allocation5] sm:$0x3]
    %v46 = vperm.slane %v44, 0
    %v47 = vperm.slane %v44, 1
    %v48 = vrot.slane %v47, 6
    %vm49 = vcmask 1041408
    %v50 = vsel %vm49, %v46, %v48
    %v52 = vmul.f32 %v43, %v50
    %53 = vst [vmem:[#allocation7] sm:$0xf] %v52
    %v54 = vsub.f32 1.0, %v44
    %v56 = vperm.slane %v54, 0
    %v57 = vperm.slane %v54, 1
    %v58 = vrot.slane %v57, 6
    %v59 = vsel %vm49, %v56, %v58
    %v61 = vmul.f32 %v43, %v59
    %62 = vst [vmem:[#allocation8] sm:$0xf] %v61
    // Predicated region
    $region18: #{tpu_custom_call.1} parent=1 // pred_check
      _
    $region19: #{tpu_custom_call.1} parent=1 // pred_check_branch
      %64 = sbr.rel (0) target = $region21
    $region20: #{tpu_custom_call.1} parent=1 // pred_region
      %66 = vsyncadd [#allocation4], 0
      %s68 = sshll.u32 [#allocation7], 4
      %s69 = int_to_ptr.vmem [resolvable:$true] %s68
      %s70 = sshll.u32 %s2, 4
      %s71 = int_to_ptr.hbm [resolvable:$true] %s70
      %73 = dma.vmem_to_hbm [thread:$0]  %s69, 64, %s71, [#allocation4]
    $region21: #{tpu_custom_call.1} parent=1 // pred_fallthru
      _
    // Predicated region
    $region22: #{tpu_custom_call.1} parent=1 // pred_check
      _
    $region23: #{tpu_custom_call.1} parent=1 // pred_check_branch
      %75 = sbr.rel (0) target = $region25
    $region24: #{tpu_custom_call.1} parent=1 // pred_region
      %77 = vsyncadd [#allocation9], 0
      %s79 = sshll.u32 [#allocation8], 4
      %s80 = int_to_ptr.vmem [resolvable:$true] %s79
      %s81 = sshll.u32 %s3, 4
      %s82 = int_to_ptr.hbm [resolvable:$true] %s81
      %84 = dma.vmem_to_hbm [thread:$0]  %s80, 64, %s82, [#allocation9]
    $region25: #{tpu_custom_call.1} parent=1 // pred_fallthru
      _
    // Predicated region
    $region26: #{tpu_custom_call.1} parent=1 // pred_check
      _
    $region27: #{tpu_custom_call.1} parent=1 // pred_check_branch
      %86 = sbr.rel (0) target = $region29
    $region28: #{tpu_custom_call.1} parent=1 // pred_region
      %88 = dma.done [#allocation4], 64
    $region29: #{tpu_custom_call.1} parent=1 // pred_fallthru
      _
    // Predicated region
    $region30: #{tpu_custom_call.1} parent=1 // pred_check
      _
    $region31: #{tpu_custom_call.1} parent=1 // pred_check_branch
      %90 = sbr.rel (0) target = $region33
    $region32: #{tpu_custom_call.1} parent=1 // pred_region
      %92 = dma.done [#allocation9], 64
    $region33: #{tpu_custom_call.1} parent=1 // pred_fallthru
      _
    %93 = vsyncpa [#allocation3], 1
    %94 = vsyncpa [#allocation6], 1
    %95 = vsyncpa [#allocation4], 1
    %96 = vsyncpa [#allocation9], 1

</llo_original>
